<compile_context>
chip_gen: v5e
topology: v5e:2x2
jax: 0.10.0
libtpu: 0.0.40
codegen_flags: <defaults>
</compile_context>

<pallas_src>
import functools

import jax
import jax.numpy as jnp
from jax.experimental import pallas as pl
from jax.experimental.pallas import tpu as pltpu


def _tree_sum(parts):
    """Pairwise tree reduction of equal-shaped arrays (short add chains, good ILP)."""
    while len(parts) > 1:
        nxt = [parts[i] + parts[i + 1] for i in range(0, len(parts) - 1, 2)]
        if len(parts) % 2:
            nxt.append(parts[-1])
        parts = nxt
    return parts[0]


def _fold_to_vreg(t):
    """Reduce an (rt, v) f32 tile to an (8, 128) partial using only vreg adds.

    Requires rt % 8 == 0 and v % 128 == 0.  Slices are static and on (8, 128)
    tile boundaries, so this is a tree of elementwise vreg adds (no XLU reduce).
    """
    rt, v = t.shape
    lane = _tree_sum([t[:, b * 128:(b + 1) * 128] for b in range(v // 128)])  # (rt, 128)
    return _tree_sum([lane[a * 8:(a + 1) * 8, :] for a in range(rt // 8)])    # (8, 128)


def _jsd_kernel(p_ref, q_ref, o_ref, *, fold_lanes):
    # Upcast per tile; inputs stay narrow (e.g. bf16) in HBM to halve traffic.
    p = p_ref[...].astype(jnp.float32)
    q = q_ref[...].astype(jnp.float32)

    # Shifted logits are reused for both the softmax denominator and the
    # log-prob difference -> only 2 tile-sized exps total.
    ps = p - jnp.max(p, axis=-1, keepdims=True)
    qs = q - jnp.max(q, axis=-1, keepdims=True)
    ep = jnp.exp(ps)
    eq = jnp.exp(qs)
    sp = jnp.sum(ep, axis=-1, keepdims=True)
    sq = jnp.sum(eq, axis=-1, keepdims=True)

    # Probabilities via per-row reciprocal (no per-element divide, no second exp).
    inv_sp = 1.0 / sp
    inv_sq = 1.0 / sq
    pp = ep * inv_sp
    pq = eq * inv_sq
    # dlog == lp - lq.  (lp - m = 0.5*(lp - lq); the 0.5 and the 1/N batchmean
    # factor are applied once in the wrapper.)
    dlog = (ps - qs) + jnp.log(sq * inv_sp)

    t = (pp - pq) * dlog  # elementwise contribution (x2 of exp(lp)(lp-m)+exp(lq)(lq-m))

    if fold_lanes:
        # Fold the whole tile to one (8, 128) vreg partial; lane-dense store.
        o_ref[0] = _fold_to_vreg(t)
    else:
        # V not a multiple of 128: single in-vreg reduce; wrapper reads [i, 0, 0].
        o_ref[0] = jnp.broadcast_to(jnp.sum(t), o_ref.shape[1:])


def _round_up(a, m):
    return -(-a // m) * m


def _plan(n, v, itemsize):
    """Pick (rows_per_tile, num_tiles, padded_rows, vmem_limit_bytes)."""
    # Sublane packing of the input dtype (f32 -> 8, bf16 -> 16, int8/fp8 -> 32).
    base = 8 if itemsize >= 4 else (16 if itemsize == 2 else 32)

    try:
        vmem_phys = pltpu.get_tpu_info().vmem_capacity_bytes
    except Exception:
        vmem_phys = 64 << 20  # assume the smallest (v7x per-core) VMEM

    # Per-input block cap in *input* bytes.  Budget: 2 inputs x 2 pipeline buffers
    # x block + ~6 tile-sized f32 temporaries (p/q upcasts, ps/qs, ep/eq, t).
    #   v7x  (64 MiB physical, 3.2 TB/s): ~2 MiB blocks.
    #   v5e/v6e (128 MiB physical, HBM-bound): ~4 MiB blocks to amortize the
    #   ~0.35 us per-grid-step overhead.
    cap_bytes = (2 << 20) if vmem_phys <= (64 << 20) else (4 << 20)
    cap_rows = max(base, (cap_bytes // max(1, v * itemsize)) // base * base)
    # TODO(synk): V-chunked online-logsumexp path for V large enough that even
    # `base` rows exceed the cap (V >~ 64K f32); until then the full row is one block.

    n_base = _round_up(n, base)
    num_tiles = -(-n_base // cap_rows)
    if num_tiles == 1 and n_base >= 2 * base:
        num_tiles = 2  # keep both v7x TensorCores busy on the "parallel" axis
    rt = _round_up(-(-n_base // num_tiles), base)   # rt <= cap_rows by construction
    n_pad = rt * num_tiles

    # Raise the scoped VMEM limit (v5e default is 16 MiB); leave 25% headroom.
    vmem_limit = max(32 << 20, min(int(vmem_phys * 3 // 4), 128 << 20))
    return rt, num_tiles, n_pad, vmem_limit


def jsd(p, q):
    """Forward pass of the JSD module.  p, q: any shape, softmax over last dim."""
    v = p.shape[-1]
    p2 = p.reshape(-1, v)
    q2 = q.reshape(-1, v)
    n = p2.shape[0]
    itemsize = jnp.dtype(p2.dtype).itemsize

    rt, num_tiles, n_pad, vmem_limit = _plan(n, v, itemsize)
    if n_pad != n:
        # Padding rows are identical in p and q -> (pp - pq) == 0 and dlog == 0,
        # so they contribute exactly zero; batchmean divides by the original n.
        p2 = jnp.pad(p2, ((0, n_pad - n), (0, 0)))
        q2 = jnp.pad(q2, ((0, n_pad - n), (0, 0)))

    fold_lanes = (v % 128 == 0)
    kernel = functools.partial(_jsd_kernel, fold_lanes=fold_lanes)

    out = pl.pallas_call(
        kernel,
        out_shape=jax.ShapeDtypeStruct((num_tiles, 8, 128), jnp.float32),
        grid_spec=pltpu.PrefetchScalarGridSpec(
            num_scalar_prefetch=0,
            grid=(num_tiles,),
            in_specs=[
                pl.BlockSpec((rt, v), lambda i: (i, 0)),
                pl.BlockSpec((rt, v), lambda i: (i, 0)),
            ],
            out_specs=pl.BlockSpec((1, 8, 128), lambda i: (i, 0, 0)),
        ),
        compiler_params=pltpu.CompilerParams(
            dimension_semantics=("parallel",),
            vmem_limit_bytes=vmem_limit,
        ),
    )(p2, q2)

    total = jnp.sum(out) if fold_lanes else jnp.sum(out[:, 0, 0])
    # 0.5 (JSD average of the two KLs) * 0.5 (|lp - m| factor) / N (batchmean).
    return total * jnp.float32(0.25 / n)


def _jsd_ref(p, q):
    v = p.shape[-1]
    lp = jax.nn.log_softmax(p.reshape(-1, v).astype(jnp.float32), axis=-1)
    lq = jax.nn.log_softmax(q.reshape(-1, v).astype(jnp.float32), axis=-1)
    m = 0.5 * (lp + lq)
    n = lp.shape[0]
    kl1 = jnp.sum(jnp.exp(lp) * (lp - m)) / n
    kl2 = jnp.sum(jnp.exp(lq) * (lq - m)) / n
    return 0.5 * (kl1 + kl2)


if __name__ == "__main__":
    keys = jax.random.split(jax.random.PRNGKey(0), 10)

    # 1) (2, 8, 128) f32 -> (16, 128): two row tiles (one per v7x TensorCore).
    p = jax.random.normal(keys[0], (2, 8, 128), dtype=jnp.float32)
    q = jax.random.normal(keys[1], (2, 8, 128), dtype=jnp.float32)
    out = jax.block_until_ready(jsd(p, q))
    ref = _jsd_ref(p, q)
    assert jnp.allclose(out, ref, rtol=1e-5, atol=1e-6), (out, ref)

    # 2) (2, 48, 256) f32 -> (96, 256): multi-vreg lane/sublane fold per tile.
    p2 = jax.random.normal(keys[2], (2, 48, 256), dtype=jnp.float32)
    q2 = jax.random.normal(keys[3], (2, 48, 256), dtype=jnp.float32)
    out2 = jax.block_until_ready(jsd(p2, q2))
    ref2 = _jsd_ref(p2, q2)
    assert jnp.allclose(out2, ref2, rtol=1e-5, atol=1e-6), (out2, ref2)

    # 3) (3, 5, 128) f32 -> (15, 128): N not a multiple of 8 -> zero-contribution padding.
    p3 = jax.random.normal(keys[4], (3, 5, 128), dtype=jnp.float32)
    q3 = jax.random.normal(keys[5], (3, 5, 128), dtype=jnp.float32)
    out3 = jax.block_until_ready(jsd(p3, q3))
    ref3 = _jsd_ref(p3, q3)
    assert jnp.allclose(out3, ref3, rtol=1e-5, atol=1e-6), (out3, ref3)

    # 4) (2, 16, 256) bf16: native narrow-dtype inputs (kernel upcasts per tile).
    p4 = jax.random.normal(keys[6], (2, 16, 256), dtype=jnp.bfloat16)
    q4 = jax.random.normal(keys[7], (2, 16, 256), dtype=jnp.bfloat16)
    out4 = jax.block_until_ready(jsd(p4, q4))
    ref4 = _jsd_ref(p4, q4)
    assert jnp.allclose(out4, ref4, rtol=1e-5, atol=1e-6), (out4, ref4)

    # 5) (4, 6, 96) f32: V not a multiple of 128 -> in-kernel scalar-reduce fallback.
    p5 = jax.random.normal(keys[8], (4, 6, 96), dtype=jnp.float32)
    q5 = jax.random.normal(keys[9], (4, 6, 96), dtype=jnp.float32)
    out5 = jax.block_until_ready(jsd(p5, q5))
    ref5 = _jsd_ref(p5, q5)
    assert jnp.allclose(out5, ref5, rtol=1e-5, atol=1e-6), (out5, ref5)

    print("KERNEL_OK")
</pallas_src>

<mosaic_0001>
module attributes {stable_mosaic.version = 11 : i64} {
  func.func @_jsd_kernel(%arg0: i32, %arg1: memref<8x128xf32, #tpu.memory_space<vmem>>, %arg2: memref<8x128xf32, #tpu.memory_space<vmem>>, %arg3: memref<1x8x128xf32, #tpu.memory_space<vmem>>) attributes {dimension_semantics = [#tpu.dimension_semantics<parallel>], iteration_bounds = array<i64: 2>, scalar_prefetch = 0 : i64, scratch_operands = 0 : i64, tpu.core_type = #tpu.core_type<tc>, window_params = [{transform_indices = @transform_0, window_bounds = array<i64: 8, 128>}, {transform_indices = @transform_1, window_bounds = array<i64: 8, 128>}, {transform_indices = @transform_2, window_bounds = array<i64: 1, 8, 128>}]} {
    %c0 = arith.constant 0 : index
    %c0_0 = arith.constant 0 : index
    %0 = vector.load %arg1[%c0, %c0_0] : memref<8x128xf32, #tpu.memory_space<vmem>>, vector<8x128xf32>
    %c0_1 = arith.constant 0 : index
    %c0_2 = arith.constant 0 : index
    %1 = vector.load %arg2[%c0_1, %c0_2] : memref<8x128xf32, #tpu.memory_space<vmem>>, vector<8x128xf32>
    %cst = arith.constant dense<0xFF800000> : vector<8xf32>
    %2 = vector.multi_reduction <maximumf>, %0, %cst [1] : vector<8x128xf32> to vector<8xf32>
    %3 = vector.shape_cast %2 : vector<8xf32> to vector<8x1xf32>
    %4 = vector.broadcast %3 : vector<8x1xf32> to vector<8x128xf32>
    %5 = arith.subf %0, %4 : vector<8x128xf32>
    %cst_3 = arith.constant dense<0xFF800000> : vector<8xf32>
    %6 = vector.multi_reduction <maximumf>, %1, %cst_3 [1] : vector<8x128xf32> to vector<8xf32>
    %7 = vector.shape_cast %6 : vector<8xf32> to vector<8x1xf32>
    %8 = vector.broadcast %7 : vector<8x1xf32> to vector<8x128xf32>
    %9 = arith.subf %1, %8 : vector<8x128xf32>
    %10 = math.exp %5 : vector<8x128xf32>
    %11 = math.exp %9 : vector<8x128xf32>
    %cst_4 = arith.constant dense<0.000000e+00> : vector<8xf32>
    %12 = vector.multi_reduction <add>, %10, %cst_4 [1] : vector<8x128xf32> to vector<8xf32>
    %13 = vector.shape_cast %12 : vector<8xf32> to vector<8x1xf32>
    %cst_5 = arith.constant dense<0.000000e+00> : vector<8xf32>
    %14 = vector.multi_reduction <add>, %11, %cst_5 [1] : vector<8x128xf32> to vector<8xf32>
    %15 = vector.shape_cast %14 : vector<8xf32> to vector<8x1xf32>
    %cst_6 = arith.constant 1.000000e+00 : f32
    %16 = vector.broadcast %cst_6 : f32 to vector<8x1xf32>
    %17 = arith.divf %16, %13 : vector<8x1xf32>
    %cst_7 = arith.constant 1.000000e+00 : f32
    %18 = vector.broadcast %cst_7 : f32 to vector<8x1xf32>
    %19 = arith.divf %18, %15 : vector<8x1xf32>
    %20 = vector.broadcast %17 : vector<8x1xf32> to vector<8x128xf32>
    %21 = arith.mulf %10, %20 : vector<8x128xf32>
    %22 = vector.broadcast %19 : vector<8x1xf32> to vector<8x128xf32>
    %23 = arith.mulf %11, %22 : vector<8x128xf32>
    %24 = arith.subf %5, %9 : vector<8x128xf32>
    %25 = arith.mulf %15, %17 : vector<8x1xf32>
    %26 = math.log %25 : vector<8x1xf32>
    %27 = vector.broadcast %26 : vector<8x1xf32> to vector<8x128xf32>
    %28 = arith.addf %24, %27 : vector<8x128xf32>
    %29 = arith.subf %21, %23 : vector<8x128xf32>
    %30 = arith.mulf %29, %28 : vector<8x128xf32>
    %c0_8 = arith.constant 0 : index
    %c0_9 = arith.constant 0 : index
    %c0_10 = arith.constant 0 : index
    %31 = vector.load %arg3[%c0_8, %c0_9, %c0_10] : memref<1x8x128xf32, #tpu.memory_space<vmem>>, vector<1x8x128xf32>
    %32 = vector.shape_cast %31 : vector<1x8x128xf32> to vector<8x128xf32>
    %33 = vector.shape_cast %30 : vector<8x128xf32> to vector<1x8x128xf32>
    tpu.vector_store %arg3[%c0_8, %c0_9, %c0_10], %33 {strides = array<i32>} : memref<1x8x128xf32, #tpu.memory_space<vmem>>, vector<1x8x128xf32>,
    return
  }
  func.func @transform_0(%arg0: i32) -> (i32, i32) {
    %c0_i32 = arith.constant 0 : i32
    %c0_i32_0 = arith.constant 0 : i32
    return %arg0, %c0_i32 : i32, i32
  }
  func.func @transform_1(%arg0: i32) -> (i32, i32) {
    %c0_i32 = arith.constant 0 : i32
    %c0_i32_0 = arith.constant 0 : i32
    return %arg0, %c0_i32 : i32, i32
  }
  func.func @transform_2(%arg0: i32) -> (i32, i32, i32) {
    %c0_i32 = arith.constant 0 : i32
    %c0_i32_0 = arith.constant 0 : i32
    %c0_i32_1 = arith.constant 0 : i32
    return %arg0, %c0_i32, %c0_i32_0 : i32, i32, i32
  }
}

</mosaic_0001>

<llo_original>
// kernel: tpu_custom_call.1
$region0: #{tpu_custom_call.1}
  #allocation0 [shape = 'u32[]', space=smem, size = 0x4, offset = 0x4, fixed_abs, tag = 'smem constant byte address 0x4 - core index']
  #allocation1 [shape = 'u32[72,128]{1,0:T(1,128)}', space=vmem, size = 0x9000, scoped, tag = 'internal scratch']
  %s0 = inlined_call_operand.hbm [shape: f32[16,128], index: 0, kind: input, shape index: {}]
  %s1 = inlined_call_operand.hbm [shape: f32[16,128], index: 1, kind: input, shape index: {}]
  %s2 = inlined_call_operand.hbm [shape: f32[2,8,128], index: 2, kind: output, shape index: {}]
  %s3 = sld [smem:[#allocation0]]
  $region49: #{tpu_custom_call.1} parent=0
    _
  %s5 = ssub.s32 1, %s3
  %s6 = scalar_select 0, %s5, %s3
  $region1: #{tpu_custom_call.1} parent=0
    #allocation2 [shape = 'u8[8192]{0}', space=vmem, size = 0x2000, scoped, tag = 'input window, operand 0']
    #allocation3 [shape = 's32[2]{0}', space=sflag, size = 0x8, scoped, tag = 'scoped memory for tpu_custom_call.1']
    #allocation4 [shape = 's32[2]{0}', space=sflag, size = 0x8, scoped, tag = 'scoped memory for tpu_custom_call.1']
    #allocation5 [shape = 'u8[8192]{0}', space=vmem, size = 0x2000, scoped, tag = 'input window, operand 1']
    #allocation6 [shape = 's32[2]{0}', space=sflag, size = 0x8, scoped, tag = 'scoped memory for tpu_custom_call.1']
    #allocation7 [shape = 'u8[8192]{0}', space=vmem, size = 0x2000, scoped, tag = 'output window, operand 0']
    %7 = vsyncpa [#allocation3], 0
    %s8 = scalar_lea.sflag [#allocation3], 1
    %9 = vsyncpa %s8, 0
    %10 = vsyncpa [#allocation6], 0
    %s11 = scalar_lea.sflag [#allocation6], 1
    %12 = vsyncpa %s11, 0
    %13 = vsyncpa [#allocation4], 0
    %s14 = scalar_lea.sflag [#allocation4], 1
    %15 = vsyncpa %s14, 0
    loop: start=0, step=1, limit=4
    $region2: #{tpu_custom_call.1} parent=1 // loop_pre_header
      _
    $region3: #{tpu_custom_call.1} parent=1 // loop_header
      %s17 = sphi 0, %s21
      %p18 = scmp.ge.s32.totalorder %s17, 4
      %s27 = sphi 0, %s29
      %s30 = sphi 0, %s27
      %s31 = sphi 0, %s30
      %s47 = sphi 0, %s31
      %s53 = sphi 0, %s55
      %s56 = sphi 0, %s53
      %s57 = sphi 0, %s56
      %s73 = sphi 0, %s57
      %s79 = sphi 0, %s81
      %s82 = sphi 0, %s79
      %s83 = sphi 0, %s82
      %s99 = sphi 0, %s83
    $region4: #{tpu_custom_call.1} parent=1 // loop_header_branch
      %20 = sbr.rel (%p18) target = $region8
    $region5: #{tpu_custom_call.1} parent=1 // loop_body
      %s22 = ssub.s32 %s17, 1
      %s23 = ssub.s32 %s17, 2
      %s24 = sadd.s32 %s17, 1
      %s25 = ssub.s32 %s17, %s24
      %p26 = scmp.eq.s32.totalorder %s25, 0
      %s28 = sadd.s32 %s27, 1
      %s29 = scalar_select %p26, %s27, %s28
      %p32 = pneg %p26
      %p33 = scmp.eq.s32.totalorder %s17, 1
      %p34 = por %p32, %p33
      %p35 = scmp.ne.s32.totalorder %s27, %s30
      %p36 = scmp.eq.s32.totalorder %s17, 0
      %p37 = por %p35, %p36
      %p38 = scmp.ne.s32.totalorder %s27, %s30
      %p39 = scmp.eq.s32.totalorder %s22, 1
      %p40 = por %p38, %p39
      %p41 = scmp.ne.s32.totalorder %s30, %s31
      %p42 = scmp.eq.s32.totalorder %s22, 0
      %p43 = por %p41, %p42
      %p44 = scmp.ne.s32.totalorder %s30, %s31
      %p45 = scmp.eq.s32.totalorder %s23, 1
      %p46 = por %p44, %p45
      %p48 = scmp.ne.s32.totalorder %s31, %s47
      %p49 = scmp.eq.s32.totalorder %s23, 0
      %p50 = por %p48, %p49
      %s51 = ssub.s32 %s17, %s24
      %p52 = scmp.eq.s32.totalorder %s51, 0
      %s54 = sadd.s32 %s53, 1
      %s55 = scalar_select %p52, %s53, %s54
      %p58 = pneg %p52
      %p59 = scmp.eq.s32.totalorder %s17, 1
      %p60 = por %p58, %p59
      %p61 = scmp.ne.s32.totalorder %s53, %s56
      %p62 = scmp.eq.s32.totalorder %s17, 0
      %p63 = por %p61, %p62
      %p64 = scmp.ne.s32.totalorder %s53, %s56
      %p65 = scmp.eq.s32.totalorder %s22, 1
      %p66 = por %p64, %p65
      %p67 = scmp.ne.s32.totalorder %s56, %s57
      %p68 = scmp.eq.s32.totalorder %s22, 0
      %p69 = por %p67, %p68
      %p70 = scmp.ne.s32.totalorder %s56, %s57
      %p71 = scmp.eq.s32.totalorder %s23, 1
      %p72 = por %p70, %p71
      %p74 = scmp.ne.s32.totalorder %s57, %s73
      %p75 = scmp.eq.s32.totalorder %s23, 0
      %p76 = por %p74, %p75
      %s77 = ssub.s32 %s17, %s24
      %p78 = scmp.eq.s32.totalorder %s77, 0
      %s80 = sadd.s32 %s79, 1
      %s81 = scalar_select %p78, %s79, %s80
      %p84 = pneg %p78
      %p85 = scmp.eq.s32.totalorder %s17, 1
      %p86 = por %p84, %p85
      %p87 = scmp.ne.s32.totalorder %s79, %s82
      %p88 = scmp.eq.s32.totalorder %s17, 0
      %p89 = por %p87, %p88
      %p90 = scmp.ne.s32.totalorder %s79, %s82
      %p91 = scmp.eq.s32.totalorder %s22, 1
      %p92 = por %p90, %p91
      %p93 = scmp.ne.s32.totalorder %s82, %s83
      %p94 = scmp.eq.s32.totalorder %s22, 0
      %p95 = por %p93, %p94
      %p96 = scmp.ne.s32.totalorder %s82, %s83
      %p97 = scmp.eq.s32.totalorder %s23, 1
      %p98 = por %p96, %p97
      %p100 = scmp.ne.s32.totalorder %s83, %s99
      %p101 = scmp.eq.s32.totalorder %s23, 0
      %p102 = por %p100, %p101
      %p103 = scmp.le.s32.totalorder 1, %s17
      %p104 = scmp.lt.s32.totalorder %s17, 3
      %p105 = pnand %p103, %p104
      %p106 = pneg %p105
      // Predicated region
      $region9: #{tpu_custom_call.1} parent=5 // pred_check
        _
      $region10: #{tpu_custom_call.1} parent=5 // pred_check_branch
        %108 = sbr.rel (%p105) target = $region12
      $region11: #{tpu_custom_call.1} parent=5 // pred_region
        %s109 = ssub.s32 %s17, 1
      $region12: #{tpu_custom_call.1} parent=5 // pred_fallthru
        _
      %p110 = scmp.lt.s32.totalorder %s17, 2
      // Predicated region
      $region13: #{tpu_custom_call.1} parent=5 // pred_check
        %p111 = pneg %p110
      $region14: #{tpu_custom_call.1} parent=5 // pred_check_branch
        %113 = sbr.rel (%p111) target = $region16
      $region15: #{tpu_custom_call.1} parent=5 // pred_region
        // Predicated region
        $region17: #{tpu_custom_call.1} parent=15 // pred_check
          %p114 = pneg %p37
        $region18: #{tpu_custom_call.1} parent=15 // pred_check_branch
          %116 = sbr.rel (%p114) target = $region20
        $region19: #{tpu_custom_call.1} parent=15 // pred_region
          %s117 = sand.u32 %s27, 1
          %s118 = scalar_lea.sflag [#allocation3], %s117
          %s119 = sand.u32 %s27, 1
          %s120 = smul.addr %s119, 8
          %s121 = scalar_lea.vmem [#allocation2], %s120
          %123 = vsyncadd %s118, 0
          %s124 = smul.addr %s17, 8
          %s125 = scalar_lea.hbm %s0, %s124
          %s127 = sshll.u32 %s125, 4
          %s128 = int_to_ptr.hbm [resolvable:$true] %s127
          %s129 = sshll.u32 %s121, 4
          %s130 = int_to_ptr.vmem [resolvable:$true] %s129
          %132 = dma.hbm_to_vmem [thread:$0]  %s128, 128, %s130, %s118
        $region20: #{tpu_custom_call.1} parent=15 // pred_fallthru
          _
        // Predicated region
        $region21: #{tpu_custom_call.1} parent=15 // pred_check
          %p133 = pneg %p63
        $region22: #{tpu_custom_call.1} parent=15 // pred_check_branch
          %135 = sbr.rel (%p133) target = $region24
        $region23: #{tpu_custom_call.1} parent=15 // pred_region
          %s136 = sand.u32 %s53, 1
          %s137 = scalar_lea.sflag [#allocation6], %s136
          %s138 = sand.u32 %s53, 1
          %s139 = smul.addr %s138, 8
          %s140 = scalar_lea.vmem [#allocation5], %s139
          %142 = vsyncadd %s137, 0
          %s143 = smul.addr %s17, 8
          %s144 = scalar_lea.hbm %s1, %s143
          %s146 = sshll.u32 %s144, 4
          %s147 = int_to_ptr.hbm [resolvable:$true] %s146
          %s148 = sshll.u32 %s140, 4
          %s149 = int_to_ptr.vmem [resolvable:$true] %s148
          %151 = dma.hbm_to_vmem [thread:$0]  %s147, 128, %s149, %s137
        $region24: #{tpu_custom_call.1} parent=15 // pred_fallthru
          _
      $region16: #{tpu_custom_call.1} parent=5 // pred_fallthru
        _
      %p152 = scmp.le.s32.totalorder 1, %s17
      %p153 = scmp.lt.s32.totalorder %s17, 3
      %p154 = pnand %p152, %p153
      %p155 = pneg %p154
      // Predicated region
      $region25: #{tpu_custom_call.1} parent=5 // pred_check
        _
      $region26: #{tpu_custom_call.1} parent=5 // pred_check_branch
        %157 = sbr.rel (%p154) target = $region28
      $region27: #{tpu_custom_call.1} parent=5 // pred_region
        %s158 = ssub.s32 %s17, 1
        %s159 = sand.u32 %s30, 1
        %s160 = scalar_lea.sflag [#allocation3], %s159
        %s161 = sand.u32 %s30, 1
        %s162 = smul.addr %s161, 8
        %s163 = scalar_lea.vmem [#allocation2], %s162
        // Predicated region
        $region29: #{tpu_custom_call.1} parent=27 // pred_check
          %p164 = pneg %p43
        $region30: #{tpu_custom_call.1} parent=27 // pred_check_branch
          %166 = sbr.rel (%p164) target = $region32
        $region31: #{tpu_custom_call.1} parent=27 // pred_region
          %168 = dma.done %s160, 128
        $region32: #{tpu_custom_call.1} parent=27 // pred_fallthru
          _
        %s169 = sand.u32 %s56, 1
        %s170 = scalar_lea.sflag [#allocation6], %s169
        %s171 = sand.u32 %s56, 1
        %s172 = smul.addr %s171, 8
        %s173 = scalar_lea.vmem [#allocation5], %s172
        // Predicated region
        $region33: #{tpu_custom_call.1} parent=27 // pred_check
          %p174 = pneg %p69
        $region34: #{tpu_custom_call.1} parent=27 // pred_check_branch
          %176 = sbr.rel (%p174) target = $region36
        $region35: #{tpu_custom_call.1} parent=27 // pred_region
          %178 = dma.done %s170, 128
        $region36: #{tpu_custom_call.1} parent=27 // pred_fallthru
          _
        %s179 = sand.u32 %s30, 1
        %s180 = scalar_lea.sflag [#allocation3], %s179
        %s181 = sand.u32 %s30, 1
        %s182 = smul.addr %s181, 8
        %s183 = scalar_lea.vmem [#allocation2], %s182
        %p184 = pneg %p43
        %p185 = pneg %p40
        %s186 = sand.u32 %s56, 1
        %s187 = scalar_lea.sflag [#allocation6], %s186
        %s188 = sand.u32 %s56, 1
        %s189 = smul.addr %s188, 8
        %s190 = scalar_lea.vmem [#allocation5], %s189
        %p191 = pneg %p69
        %p192 = pneg %p66
        %p193 = pneg %p95
        %p194 = pneg %p92
        %s195 = sand.u32 %s82, 1
        %s196 = scalar_lea.sflag [#allocation4], %s195
        %s197 = sand.u32 %s82, 1
        %s198 = smul.addr %s197, 8
        %s199 = scalar_lea.vmem [#allocation7], %s198
        %v200 = vld [vmem:[%s163] sm:$0xff]
        %v201 = vld [vmem:[%s173] sm:$0xff]
        %202 = vmax.xlane.f32.xlu0 %v200
        %v203 = vpop.xlane.xlu0 %202
        %v204 = vsub.f32 %v200, %v203
        %205 = vmax.xlane.f32.xlu0 %v201
        %v206 = vpop.xlane.xlu0 %205
        %v207 = vsub.f32 %v201, %v206
        %v208 = vmul.f32 %v204, 1.442695
        %v209 = vpow.pop %v208
        %v210 = vmul.f32 %v207, 1.442695
        %v211 = vpow.pop %v210
        %212 = vadd.xlane.f32.xlu0 %v209
        %v213 = vpop.xlane.xlu0 %212
        %214 = vadd.xlane.f32.xlu0 %v211
        %v215 = vpop.xlane.xlu0 %214
        %v216 = vrcp.pop %v213
        %v217 = vmul.f32 %v213, %v216
        %v218 = vsub.f32 1.0, %v217
        %v219 = vmul.f32 %v216, %v218
        %v220 = vadd.f32 %v216, %v219
        %vm221 = vweird.f32 %v213
        %vm222 = vweird.f32 %v216
        %vm223 = vmor %vm221, %vm222
        %v224 = vsel %vm223, %v216, %v220
        %v225 = vand.u32 2147483647, %v213
        %vm226 = vcmp.eq.f32.partialorder %v225, 8.507059e+37
        %v227 = vand.u32 %v213, 2147483648
        %v228 = vor.u32 1.1754944e-38, %v227
        %v229 = vsel %vm226, %v228, %v224
        %v230 = vmul.f32 1.0, %v229
        %v231 = vrcp.pop %v215
        %v232 = vmul.f32 %v215, %v231
        %v233 = vsub.f32 1.0, %v232
        %v234 = vmul.f32 %v231, %v233
        %v235 = vadd.f32 %v231, %v234
        %vm236 = vweird.f32 %v215
        %vm237 = vweird.f32 %v231
        %vm238 = vmor %vm236, %vm237
        %v239 = vsel %vm238, %v231, %v235
        %v240 = vand.u32 2147483647, %v215
        %vm241 = vcmp.eq.f32.partialorder %v240, 8.507059e+37
        %v242 = vand.u32 %v215, 2147483648
        %v243 = vor.u32 1.1754944e-38, %v242
        %v244 = vsel %vm241, %v243, %v239
        %v245 = vmul.f32 1.0, %v244
        %v246 = vmul.f32 %v209, %v230
        %v247 = vmul.f32 %v211, %v245
        %v248 = vsub.f32 %v204, %v207
        %v249 = vmul.f32 %v215, %v230
        %v250 = vlog2.pop %v249
        %v251 = vmul.f32 %v250, 0.6931472
        %v252 = vadd.f32 %v248, %v251
        %v253 = vsub.f32 %v246, %v247
        %v254 = vmul.f32 %v253, %v252
        %255 = vst [vmem:[%s199] sm:$0xff] %v254
        %s256 = sand.u32 %s82, 1
        %s257 = scalar_lea.sflag [#allocation4], %s256
        %s258 = sand.u32 %s82, 1
        %s259 = smul.addr %s258, 8
        %s260 = scalar_lea.vmem [#allocation7], %s259
        // Predicated region
        $region37: #{tpu_custom_call.1} parent=27 // pred_check
          %p261 = pneg %p92
        $region38: #{tpu_custom_call.1} parent=27 // pred_check_branch
          %263 = sbr.rel (%p261) target = $region40
        $region39: #{tpu_custom_call.1} parent=27 // pred_region
          %265 = vsyncadd %s257, 0
          %s266 = smul.addr %s22, 8
          %s267 = scalar_lea.hbm %s2, %s266
          %s269 = sshll.u32 %s260, 4
          %s270 = int_to_ptr.vmem [resolvable:$true] %s269
          %s271 = sshll.u32 %s267, 4
          %s272 = int_to_ptr.hbm [resolvable:$true] %s271
          %274 = dma.vmem_to_hbm [thread:$0]  %s270, 128, %s272, %s257
        $region40: #{tpu_custom_call.1} parent=27 // pred_fallthru
          _
      $region28: #{tpu_custom_call.1} parent=5 // pred_fallthru
        _
      %p275 = scmp.le.s32.totalorder 2, %s17
      // Predicated region
      $region41: #{tpu_custom_call.1} parent=5 // pred_check
        %p276 = pneg %p275
      $region42: #{tpu_custom_call.1} parent=5 // pred_check_branch
        %278 = sbr.rel (%p276) target = $region44
      $region43: #{tpu_custom_call.1} parent=5 // pred_region
        %s279 = ssub.s32 %s17, 2
        // Predicated region
        $region45: #{tpu_custom_call.1} parent=43 // pred_check
          %p280 = pneg %p98
        $region46: #{tpu_custom_call.1} parent=43 // pred_check_branch
          %282 = sbr.rel (%p280) target = $region48
        $region47: #{tpu_custom_call.1} parent=43 // pred_region
          %s283 = sand.u32 %s83, 1
          %s284 = scalar_lea.sflag [#allocation4], %s283
          %s285 = sand.u32 %s83, 1
          %s286 = smul.addr %s285, 8
          %s287 = scalar_lea.vmem [#allocation7], %s286
          %289 = dma.done %s284, 128
        $region48: #{tpu_custom_call.1} parent=43 // pred_fallthru
          _
      $region44: #{tpu_custom_call.1} parent=5 // pred_fallthru
        _
    $region6: #{tpu_custom_call.1} parent=1 // loop_footer
      %s21 = sadd.s32 1, %s17
    $region7: #{tpu_custom_call.1} parent=1 // loop_footer_branch
      %16 = sbr.rel target = $region3
    $region8: #{tpu_custom_call.1} parent=1 // loop_exit
      _
    %290 = vsyncpa [#allocation3], 1
    %s291 = scalar_lea.sflag [#allocation3], 1
    %292 = vsyncpa %s291, 1
    %293 = vsyncpa [#allocation6], 1
    %s294 = scalar_lea.sflag [#allocation6], 1
    %295 = vsyncpa %s294, 1
    %296 = vsyncpa [#allocation4], 1
    %s297 = scalar_lea.sflag [#allocation4], 1
    %298 = vsyncpa %s297, 1

</llo_original>
